<compile_context>
chip_gen: v5e
topology: v5e:2x2
jax: 0.10.0
libtpu: 0.0.40
codegen_flags: <defaults>
</compile_context>

<pallas_src>
import functools

import numpy as np
import jax
import jax.numpy as jnp
from jax.experimental import pallas as pl
from jax.experimental.pallas import tpu as pltpu


def _round_up(x, m):
    return (x + m - 1) // m * m


def _align_corners_roundtrip(loc, size):
    # The module normalizes new_locs = 2*(loc/(size-1) - 0.5); grid_sample with
    # align_corners=True un-normalizes as (g+1)/2*(size-1).  Keep the round
    # trip explicitly for numerical fidelity with the PyTorch module.
    # NOTE: size == 1 gives a division by zero, exactly like the PyTorch code.
    g = 2.0 * (loc / (size - 1.0) - 0.5)
    return (g + 1.0) * 0.5 * (size - 1.0)


def _warp_kernel(locs_ref, src_ref, out_ref, *, C, D, H, W, W8, padding):
    """One (batch, output-tile) step of the 3-D warp.

    locs_ref: (1, 3, TN)      un-normalized sample coords (z, y, x) = grid + flow
    src_ref:  (1, C*D, H*W8)  full source volume of this batch element
                              (row = c*D + z, column = y*W8 + x, x >= W is 0-pad)
    out_ref:  (1, C, TN)      warped output tile (lane-dense along TN)
    """
    f32 = jnp.float32
    HW8 = H * W8
    tn = out_ref.shape[-1]

    locs = locs_ref[0].astype(f32)                               # (3, TN)
    zc = _align_corners_roundtrip(locs[0:1, :], float(D))        # (1, TN)
    yc = _align_corners_roundtrip(locs[1:2, :], float(H))
    xc = _align_corners_roundtrip(locs[2:3, :], float(W))

    if padding == "border":
        zc = jnp.clip(zc, 0.0, D - 1.0)
        yc = jnp.clip(yc, 0.0, H - 1.0)
        xc = jnp.clip(xc, 0.0, W - 1.0)
    else:  # "zeros": keep OOB corners OOB, but bound the int cast.
        zc = jnp.clip(zc, -1.0, float(D))
        yc = jnp.clip(yc, -1.0, float(H))
        xc = jnp.clip(xc, -1.0, float(W))

    z0f, y0f, x0f = jnp.floor(zc), jnp.floor(yc), jnp.floor(xc)
    z0 = z0f.astype(jnp.int32)
    y0 = y0f.astype(jnp.int32)
    x0 = x0f.astype(jnp.int32)
    fz, fy, fx = zc - z0f, yc - y0f, xc - x0f                    # (1, TN)

    # ---- separable weighted one-hots along y and x.  Small builds
    #      ((H,1,TN) and (1,W8,TN)); the big (H*W8, TN) array is produced by a
    #      single broadcasted multiply (outer product) below. ----
    h_iota = jax.lax.broadcasted_iota(jnp.int32, (H, 1, tn), 0)
    Ry = jnp.zeros((H, 1, tn), f32)
    for dy in (0, 1):
        yi = y0 + dy
        wy = fy if dy else 1.0 - fy
        if padding == "zeros":
            wy = wy * ((yi >= 0) & (yi < H)).astype(f32)
        yi = jnp.clip(yi, 0, H - 1)
        Ry = Ry + jnp.where(h_iota == yi[None], wy[None], 0.0)

    w_iota = jax.lax.broadcasted_iota(jnp.int32, (1, W8, tn), 1)
    Rx = jnp.zeros((1, W8, tn), f32)
    for dx in (0, 1):
        xi = x0 + dx
        wx = fx if dx else 1.0 - fx
        if padding == "zeros":
            wx = wx * ((xi >= 0) & (xi < W)).astype(f32)
        xi = jnp.clip(xi, 0, W - 1)
        Rx = Rx + jnp.where(w_iota == xi[None], wx[None], 0.0)

    # Outer product -> weighted (y, x) one-hot over the padded plane.
    # W8 % 8 == 0, so the collapse is a layout-trivial tile re-indexing.
    R = (Ry * Rx).reshape(HW8, tn)                               # (H*W8, TN)

    # ---- one MXU matmul gathers, for every output voxel of the tile, the
    #      (y,x)-interpolated value at every (channel, z) row:
    #      (C*D, H*W8) @ (H*W8, TN) -> (C*D, TN), lane-dense result. ----
    gathered = jnp.dot(src_ref[0].astype(f32), R,
                       preferred_element_type=f32)               # (C*D, TN)

    # ---- final linear interpolation along z (VPU mul + XLU reduce). ----
    z_iota = jax.lax.broadcasted_iota(jnp.int32, (D, tn), 0)
    zsel = jnp.zeros((D, tn), f32)
    for dz in (0, 1):
        zi = z0 + dz
        wz = fz if dz else 1.0 - fz
        if padding == "zeros":
            wz = wz * ((zi >= 0) & (zi < D)).astype(f32)
        zi = jnp.clip(zi, 0, D - 1)
        zsel = zsel + jnp.where(z_iota == zi, wz, 0.0)

    rows = []
    for c in range(C):                      # C is small (static unrolled loop)
        g_c = gathered[c * D:(c + 1) * D, :]                     # (D, TN)
        rows.append(jnp.sum(g_c * zsel, axis=0, keepdims=True))  # (1, TN)
    warped = jnp.concatenate(rows, axis=0)                       # (C, TN)

    out_ref[0] = warped.astype(out_ref.dtype)


def transformer_3d(src, flow, padding="border", *, tile_n=512):
    """Pallas equivalent of Transformer_3D_cpu()(src, flow, padding)."""
    B, C, D, H, W = src.shape
    assert flow.shape == (B, 3, D, H, W)
    if padding not in ("border", "zeros"):
        # TODO(synk): grid_sample padding_mode='reflection' not implemented.
        raise NotImplementedError(f"padding_mode={padding!r}")

    N = D * H * W
    W8 = _round_up(W, 8)
    HW8 = H * W8
    CD = C * D

    # Base voxel grid folded into flow on the host (one fewer input stream).
    gz, gy, gx = jnp.meshgrid(jnp.arange(D), jnp.arange(H), jnp.arange(W),
                              indexing="ij")
    base = jnp.stack([gz, gy, gx]).astype(jnp.float32).reshape(3, N)
    locs = base[None] + flow.reshape(B, 3, N).astype(jnp.float32)

    # ---- VMEM budget -> lane-dense tile size TN (multiple of 128). ----
    try:
        vmem_cap = int(pltpu.get_tpu_info().vmem_capacity_bytes)
    except Exception:  # fallback: v7x per-TensorCore VMEM (smallest fleet-wide)
        vmem_cap = 64 * 1024 * 1024
    budget = int(0.6 * vmem_cap)

    def est_bytes(tn):
        return 4 * (2 * CD * HW8          # resident src block (double-buffered)
                    + 3 * HW8 * tn        # Ry/Rx broadcasts + R outer product
                    + 2 * CD * tn         # matmul result + z-weighted temp
                    + 2 * (3 + C) * tn    # locs / out double buffers
                    + (D + 8) * tn)       # zsel + misc small temporaries

    TN = _round_up(min(tile_n, _round_up(N, 128)), 128)
    while TN > 128 and est_bytes(TN) > budget:
        TN -= 128
    N_pad = _round_up(N, TN)
    if N_pad != N:
        locs = jnp.pad(locs, ((0, 0), (0, 0), (0, N_pad - N)))

    # src rows = c*D + z, cols = y*W8 + x (x >= W zero-padded so the in-kernel
    # (H, W8, TN) -> (H*W8, TN) collapse is always sublane-aligned).
    src2 = src.reshape(B, CD, H, W)
    if W8 != W:
        src2 = jnp.pad(src2, ((0, 0), (0, 0), (0, 0), (0, W8 - W)))
    src2 = src2.reshape(B, CD, HW8)

    kernel = functools.partial(_warp_kernel, C=C, D=D, H=H, W=W, W8=W8,
                               padding=padding)

    vmem_limit = int(min(vmem_cap,
                         max(32 * 1024 * 1024, int(1.5 * est_bytes(TN)))))

    out = pl.pallas_call(
        kernel,
        out_shape=jax.ShapeDtypeStruct((B, C, N_pad), src.dtype),
        grid_spec=pltpu.PrefetchScalarGridSpec(
            num_scalar_prefetch=0,
            grid=(B, N_pad // TN),      # inner axis fastest -> src stays resident
            in_specs=[
                pl.BlockSpec((1, 3, TN), lambda b, j: (b, 0, j)),    # coords
                pl.BlockSpec((1, CD, HW8), lambda b, j: (b, 0, 0)),  # src[b]
            ],
            out_specs=pl.BlockSpec((1, C, TN), lambda b, j: (b, 0, j)),
        ),
        compiler_params=pltpu.CompilerParams(
            dimension_semantics=("parallel", "parallel"),
            vmem_limit_bytes=vmem_limit),
    )(locs, src2)

    return out[:, :, :N].reshape(B, C, D, H, W)


# ----------------------------- pure-JAX reference -----------------------------

def _trilinear_corners(zc, yc, xc, D, H, W, padding):
    """[(weight, flat_index)] for the 8 trilinear corners (reference only)."""
    if padding == "border":
        zc = jnp.clip(zc, 0.0, float(D - 1))
        yc = jnp.clip(yc, 0.0, float(H - 1))
        xc = jnp.clip(xc, 0.0, float(W - 1))
    z0f, y0f, x0f = jnp.floor(zc), jnp.floor(yc), jnp.floor(xc)
    z0, y0, x0 = (z0f.astype(jnp.int32), y0f.astype(jnp.int32),
                  x0f.astype(jnp.int32))
    fz, fy, fx = zc - z0f, yc - y0f, xc - x0f
    corners = []
    for dz in (0, 1):
        for dy in (0, 1):
            for dx in (0, 1):
                zi, yi, xi = z0 + dz, y0 + dy, x0 + dx
                w = ((fz if dz else 1.0 - fz)
                     * (fy if dy else 1.0 - fy)
                     * (fx if dx else 1.0 - fx))
                if padding == "zeros":
                    inb = ((zi >= 0) & (zi < D) & (yi >= 0) & (yi < H)
                           & (xi >= 0) & (xi < W))
                    w = w * inb.astype(w.dtype)
                zi = jnp.clip(zi, 0, D - 1)
                yi = jnp.clip(yi, 0, H - 1)
                xi = jnp.clip(xi, 0, W - 1)
                corners.append((w, zi * (H * W) + yi * W + xi))
    return corners


def transformer_3d_reference(src, flow, padding="border"):
    """Pure-JAX reference (F.grid_sample trilinear, align_corners=True)."""
    B, C, D, H, W = src.shape
    N = D * H * W
    gz, gy, gx = jnp.meshgrid(jnp.arange(D), jnp.arange(H), jnp.arange(W),
                              indexing="ij")
    base = jnp.stack([gz, gy, gx]).astype(jnp.float32).reshape(3, N)
    loc = base[None] + flow.reshape(B, 3, N).astype(jnp.float32)
    zc = _align_corners_roundtrip(loc[:, 0, :], float(D))
    yc = _align_corners_roundtrip(loc[:, 1, :], float(H))
    xc = _align_corners_roundtrip(loc[:, 2, :], float(W))
    src_flat = src.reshape(B, C, N).astype(jnp.float32)
    out = jnp.zeros((B, C, N), jnp.float32)
    for w, idx in _trilinear_corners(zc, yc, xc, D, H, W, padding):
        idx_b = jnp.broadcast_to(idx[:, None, :], (B, C, N))
        vals = jnp.take_along_axis(src_flat, idx_b, axis=2)
        out = out + w[:, None, :] * vals
    return out.reshape(B, C, D, H, W).astype(src.dtype)


if __name__ == "__main__":
    key = jax.random.PRNGKey(0)
    B, C, D, H, W = 2, 4, 8, 8, 8
    k1, k2 = jax.random.split(key)
    src = jax.random.normal(k1, (B, C, D, H, W), dtype=jnp.float32)
    # Displacements with fractional parts and some out-of-bounds samples.
    flow = 3.0 * jax.random.normal(k2, (B, 3, D, H, W), dtype=jnp.float32)

    for padding in ("border", "zeros"):
        out = jax.block_until_ready(transformer_3d(src, flow, padding))
        ref = transformer_3d_reference(src, flow, padding)
        np.testing.assert_allclose(np.asarray(out), np.asarray(ref),
                                   atol=1e-2, rtol=1e-2)

    print("KERNEL_OK")
</pallas_src>

<mosaic_0001>
module attributes {stable_mosaic.version = 11 : i64} {
  func.func @_warp_kernel(%arg0: i32, %arg1: i32, %arg2: memref<1x3x512xf32, #tpu.memory_space<vmem>>, %arg3: memref<1x32x64xf32, #tpu.memory_space<vmem>>, %arg4: memref<1x4x512xf32, #tpu.memory_space<vmem>>) attributes {dimension_semantics = [#tpu.dimension_semantics<parallel>, #tpu.dimension_semantics<parallel>], iteration_bounds = array<i64: 2, 1>, scalar_prefetch = 0 : i64, scratch_operands = 0 : i64, tpu.core_type = #tpu.core_type<tc>, window_params = [{transform_indices = @transform_0, window_bounds = array<i64: 1, 3, 512>}, {transform_indices = @transform_1, window_bounds = array<i64: 1, 32, 64>}, {transform_indices = @transform_2, window_bounds = array<i64: 1, 4, 512>}]} {
    %c0 = arith.constant 0 : index
    %c0_0 = arith.constant 0 : index
    %c0_1 = arith.constant 0 : index
    %0 = vector.load %arg2[%c0, %c0_0, %c0_1] : memref<1x3x512xf32, #tpu.memory_space<vmem>>, vector<1x3x512xf32>
    %1 = vector.shape_cast %0 : vector<1x3x512xf32> to vector<3x512xf32>
    %2 = vector.extract_strided_slice %1 {offsets = [0, 0], sizes = [1, 512], strides = [1, 1]} : vector<3x512xf32> to vector<1x512xf32>
    %cst = arith.constant 7.000000e+00 : f32
    %3 = vector.broadcast %cst : f32 to vector<1x512xf32>
    %4 = arith.divf %2, %3 : vector<1x512xf32>
    %cst_2 = arith.constant 5.000000e-01 : f32
    %5 = vector.broadcast %cst_2 : f32 to vector<1x512xf32>
    %6 = arith.subf %4, %5 : vector<1x512xf32>
    %cst_3 = arith.constant 2.000000e+00 : f32
    %7 = vector.broadcast %cst_3 : f32 to vector<1x512xf32>
    %8 = arith.mulf %7, %6 : vector<1x512xf32>
    %cst_4 = arith.constant 1.000000e+00 : f32
    %9 = vector.broadcast %cst_4 : f32 to vector<1x512xf32>
    %10 = arith.addf %8, %9 : vector<1x512xf32>
    %cst_5 = arith.constant 5.000000e-01 : f32
    %11 = vector.broadcast %cst_5 : f32 to vector<1x512xf32>
    %12 = arith.mulf %10, %11 : vector<1x512xf32>
    %cst_6 = arith.constant 7.000000e+00 : f32
    %13 = vector.broadcast %cst_6 : f32 to vector<1x512xf32>
    %14 = arith.mulf %12, %13 : vector<1x512xf32>
    %15 = vector.extract_strided_slice %1 {offsets = [1, 0], sizes = [1, 512], strides = [1, 1]} : vector<3x512xf32> to vector<1x512xf32>
    %cst_7 = arith.constant 7.000000e+00 : f32
    %16 = vector.broadcast %cst_7 : f32 to vector<1x512xf32>
    %17 = arith.divf %15, %16 : vector<1x512xf32>
    %cst_8 = arith.constant 5.000000e-01 : f32
    %18 = vector.broadcast %cst_8 : f32 to vector<1x512xf32>
    %19 = arith.subf %17, %18 : vector<1x512xf32>
    %cst_9 = arith.constant 2.000000e+00 : f32
    %20 = vector.broadcast %cst_9 : f32 to vector<1x512xf32>
    %21 = arith.mulf %20, %19 : vector<1x512xf32>
    %cst_10 = arith.constant 1.000000e+00 : f32
    %22 = vector.broadcast %cst_10 : f32 to vector<1x512xf32>
    %23 = arith.addf %21, %22 : vector<1x512xf32>
    %cst_11 = arith.constant 5.000000e-01 : f32
    %24 = vector.broadcast %cst_11 : f32 to vector<1x512xf32>
    %25 = arith.mulf %23, %24 : vector<1x512xf32>
    %cst_12 = arith.constant 7.000000e+00 : f32
    %26 = vector.broadcast %cst_12 : f32 to vector<1x512xf32>
    %27 = arith.mulf %25, %26 : vector<1x512xf32>
    %28 = vector.extract_strided_slice %1 {offsets = [2, 0], sizes = [1, 512], strides = [1, 1]} : vector<3x512xf32> to vector<1x512xf32>
    %cst_13 = arith.constant 7.000000e+00 : f32
    %29 = vector.broadcast %cst_13 : f32 to vector<1x512xf32>
    %30 = arith.divf %28, %29 : vector<1x512xf32>
    %cst_14 = arith.constant 5.000000e-01 : f32
    %31 = vector.broadcast %cst_14 : f32 to vector<1x512xf32>
    %32 = arith.subf %30, %31 : vector<1x512xf32>
    %cst_15 = arith.constant 2.000000e+00 : f32
    %33 = vector.broadcast %cst_15 : f32 to vector<1x512xf32>
    %34 = arith.mulf %33, %32 : vector<1x512xf32>
    %cst_16 = arith.constant 1.000000e+00 : f32
    %35 = vector.broadcast %cst_16 : f32 to vector<1x512xf32>
    %36 = arith.addf %34, %35 : vector<1x512xf32>
    %cst_17 = arith.constant 5.000000e-01 : f32
    %37 = vector.broadcast %cst_17 : f32 to vector<1x512xf32>
    %38 = arith.mulf %36, %37 : vector<1x512xf32>
    %cst_18 = arith.constant 7.000000e+00 : f32
    %39 = vector.broadcast %cst_18 : f32 to vector<1x512xf32>
    %40 = arith.mulf %38, %39 : vector<1x512xf32>
    %cst_19 = arith.constant 0.000000e+00 : f32
    %cst_20 = arith.constant 7.000000e+00 : f32
    %41 = vector.broadcast %cst_19 : f32 to vector<1x512xf32>
    %42 = arith.maximumf %41, %14 : vector<1x512xf32>
    %43 = vector.broadcast %cst_20 : f32 to vector<1x512xf32>
    %44 = arith.minimumf %43, %42 : vector<1x512xf32>
    %cst_21 = arith.constant 0.000000e+00 : f32
    %cst_22 = arith.constant 7.000000e+00 : f32
    %45 = vector.broadcast %cst_21 : f32 to vector<1x512xf32>
    %46 = arith.maximumf %45, %27 : vector<1x512xf32>
    %47 = vector.broadcast %cst_22 : f32 to vector<1x512xf32>
    %48 = arith.minimumf %47, %46 : vector<1x512xf32>
    %cst_23 = arith.constant 0.000000e+00 : f32
    %cst_24 = arith.constant 7.000000e+00 : f32
    %49 = vector.broadcast %cst_23 : f32 to vector<1x512xf32>
    %50 = arith.maximumf %49, %40 : vector<1x512xf32>
    %51 = vector.broadcast %cst_24 : f32 to vector<1x512xf32>
    %52 = arith.minimumf %51, %50 : vector<1x512xf32>
    %53 = math.floor %44 : vector<1x512xf32>
    %54 = math.floor %48 : vector<1x512xf32>
    %55 = math.floor %52 : vector<1x512xf32>
    %56 = arith.fptosi %53 : vector<1x512xf32> to vector<1x512xi32>
    %57 = arith.fptosi %54 : vector<1x512xf32> to vector<1x512xi32>
    %58 = arith.fptosi %55 : vector<1x512xf32> to vector<1x512xi32>
    %59 = arith.subf %44, %53 : vector<1x512xf32>
    %60 = arith.subf %48, %54 : vector<1x512xf32>
    %61 = arith.subf %52, %55 : vector<1x512xf32>
    %62 = tpu.iota {dimensions = array<i32: 0>} : vector<8x1x512xi32>
    %cst_25 = arith.constant 0.000000e+00 : f32
    %63 = vector.broadcast %cst_25 : f32 to vector<8x1x512xf32>
    %c0_i32 = arith.constant 0 : i32
    %64 = vector.broadcast %c0_i32 : i32 to vector<1x512xi32>
    %65 = arith.addi %57, %64 : vector<1x512xi32>
    %cst_26 = arith.constant 1.000000e+00 : f32
    %66 = vector.broadcast %cst_26 : f32 to vector<1x512xf32>
    %67 = arith.subf %66, %60 : vector<1x512xf32>
    %c0_i32_27 = arith.constant 0 : i32
    %c7_i32 = arith.constant 7 : i32
    %68 = vector.broadcast %c0_i32_27 : i32 to vector<1x512xi32>
    %69 = arith.maxsi %68, %65 : vector<1x512xi32>
    %70 = vector.broadcast %c7_i32 : i32 to vector<1x512xi32>
    %71 = arith.minsi %70, %69 : vector<1x512xi32>
    %72 = vector.shape_cast %71 : vector<1x512xi32> to vector<1x1x512xi32>
    %73 = vector.broadcast %72 : vector<1x1x512xi32> to vector<8x1x512xi32>
    %74 = arith.cmpi eq, %62, %73 : vector<8x1x512xi32>
    %75 = vector.shape_cast %67 : vector<1x512xf32> to vector<1x1x512xf32>
    %cst_28 = arith.constant 0.000000e+00 : f32
    %76 = vector.shape_cast %75 : vector<1x1x512xf32> to vector<1x1x512xf32>
    %77 = vector.broadcast %76 : vector<1x1x512xf32> to vector<8x1x512xf32>
    %78 = vector.broadcast %cst_28 : f32 to vector<8x1x512xf32>
    %79 = arith.select %74, %77, %78 : vector<8x1x512xi1>, vector<8x1x512xf32>
    %80 = arith.addf %63, %79 : vector<8x1x512xf32>
    %c1_i32 = arith.constant 1 : i32
    %81 = vector.broadcast %c1_i32 : i32 to vector<1x512xi32>
    %82 = arith.addi %57, %81 : vector<1x512xi32>
    %c0_i32_29 = arith.constant 0 : i32
    %c7_i32_30 = arith.constant 7 : i32
    %83 = vector.broadcast %c0_i32_29 : i32 to vector<1x512xi32>
    %84 = arith.maxsi %83, %82 : vector<1x512xi32>
    %85 = vector.broadcast %c7_i32_30 : i32 to vector<1x512xi32>
    %86 = arith.minsi %85, %84 : vector<1x512xi32>
    %87 = vector.shape_cast %86 : vector<1x512xi32> to vector<1x1x512xi32>
    %88 = vector.broadcast %87 : vector<1x1x512xi32> to vector<8x1x512xi32>
    %89 = arith.cmpi eq, %62, %88 : vector<8x1x512xi32>
    %90 = vector.shape_cast %60 : vector<1x512xf32> to vector<1x1x512xf32>
    %cst_31 = arith.constant 0.000000e+00 : f32
    %91 = vector.shape_cast %90 : vector<1x1x512xf32> to vector<1x1x512xf32>
    %92 = vector.broadcast %91 : vector<1x1x512xf32> to vector<8x1x512xf32>
    %93 = vector.broadcast %cst_31 : f32 to vector<8x1x512xf32>
    %94 = arith.select %89, %92, %93 : vector<8x1x512xi1>, vector<8x1x512xf32>
    %95 = arith.addf %80, %94 : vector<8x1x512xf32>
    %96 = tpu.iota {dimensions = array<i32: 1>} : vector<1x8x512xi32>
    %cst_32 = arith.constant 0.000000e+00 : f32
    %97 = vector.broadcast %cst_32 : f32 to vector<1x8x512xf32>
    %c0_i32_33 = arith.constant 0 : i32
    %98 = vector.broadcast %c0_i32_33 : i32 to vector<1x512xi32>
    %99 = arith.addi %58, %98 : vector<1x512xi32>
    %cst_34 = arith.constant 1.000000e+00 : f32
    %100 = vector.broadcast %cst_34 : f32 to vector<1x512xf32>
    %101 = arith.subf %100, %61 : vector<1x512xf32>
    %c0_i32_35 = arith.constant 0 : i32
    %c7_i32_36 = arith.constant 7 : i32
    %102 = vector.broadcast %c0_i32_35 : i32 to vector<1x512xi32>
    %103 = arith.maxsi %102, %99 : vector<1x512xi32>
    %104 = vector.broadcast %c7_i32_36 : i32 to vector<1x512xi32>
    %105 = arith.minsi %104, %103 : vector<1x512xi32>
    %106 = vector.shape_cast %105 : vector<1x512xi32> to vector<1x1x512xi32>
    %107 = vector.broadcast %106 : vector<1x1x512xi32> to vector<1x8x512xi32>
    %108 = arith.cmpi eq, %96, %107 : vector<1x8x512xi32>
    %109 = vector.shape_cast %101 : vector<1x512xf32> to vector<1x1x512xf32>
    %cst_37 = arith.constant 0.000000e+00 : f32
    %110 = vector.shape_cast %109 : vector<1x1x512xf32> to vector<1x1x512xf32>
    %111 = vector.broadcast %110 : vector<1x1x512xf32> to vector<1x8x512xf32>
    %112 = vector.broadcast %cst_37 : f32 to vector<1x8x512xf32>
    %113 = arith.select %108, %111, %112 : vector<1x8x512xi1>, vector<1x8x512xf32>
    %114 = arith.addf %97, %113 : vector<1x8x512xf32>
    %c1_i32_38 = arith.constant 1 : i32
    %115 = vector.broadcast %c1_i32_38 : i32 to vector<1x512xi32>
    %116 = arith.addi %58, %115 : vector<1x512xi32>
    %c0_i32_39 = arith.constant 0 : i32
    %c7_i32_40 = arith.constant 7 : i32
    %117 = vector.broadcast %c0_i32_39 : i32 to vector<1x512xi32>
    %118 = arith.maxsi %117, %116 : vector<1x512xi32>
    %119 = vector.broadcast %c7_i32_40 : i32 to vector<1x512xi32>
    %120 = arith.minsi %119, %118 : vector<1x512xi32>
    %121 = vector.shape_cast %120 : vector<1x512xi32> to vector<1x1x512xi32>
    %122 = vector.broadcast %121 : vector<1x1x512xi32> to vector<1x8x512xi32>
    %123 = arith.cmpi eq, %96, %122 : vector<1x8x512xi32>
    %124 = vector.shape_cast %61 : vector<1x512xf32> to vector<1x1x512xf32>
    %cst_41 = arith.constant 0.000000e+00 : f32
    %125 = vector.shape_cast %124 : vector<1x1x512xf32> to vector<1x1x512xf32>
    %126 = vector.broadcast %125 : vector<1x1x512xf32> to vector<1x8x512xf32>
    %127 = vector.broadcast %cst_41 : f32 to vector<1x8x512xf32>
    %128 = arith.select %123, %126, %127 : vector<1x8x512xi1>, vector<1x8x512xf32>
    %129 = arith.addf %114, %128 : vector<1x8x512xf32>
    %130 = vector.broadcast %95 : vector<8x1x512xf32> to vector<8x8x512xf32>
    %131 = vector.broadcast %129 : vector<1x8x512xf32> to vector<8x8x512xf32>
    %132 = arith.mulf %130, %131 : vector<8x8x512xf32>
    %133 = vector.shape_cast %132 : vector<8x8x512xf32> to vector<64x512xf32>
    %c0_42 = arith.constant 0 : index
    %c0_43 = arith.constant 0 : index
    %c0_44 = arith.constant 0 : index
    %134 = vector.load %arg3[%c0_42, %c0_43, %c0_44] : memref<1x32x64xf32, #tpu.memory_space<vmem>>, vector<1x32x64xf32>
    %135 = vector.shape_cast %134 : vector<1x32x64xf32> to vector<32x64xf32>
    %cst_45 = arith.constant dense<0.000000e+00> : vector<32x512xf32>
    %136 = tpu.matmul %135, %133, %cst_45 {dimension_numbers = #tpu.dot_dimension_numbers<[1], [0], [0], [1], [0, 0, 1, 1], [], []>} : vector<32x64xf32>, vector<64x512xf32>, vector<32x512xf32> -> vector<32x512xf32>
    %137 = tpu.iota {dimensions = array<i32: 0>} : vector<8x512xi32>
    %cst_46 = arith.constant 0.000000e+00 : f32
    %138 = vector.broadcast %cst_46 : f32 to vector<8x512xf32>
    %c0_i32_47 = arith.constant 0 : i32
    %139 = vector.broadcast %c0_i32_47 : i32 to vector<1x512xi32>
    %140 = arith.addi %56, %139 : vector<1x512xi32>
    %cst_48 = arith.constant 1.000000e+00 : f32
    %141 = vector.broadcast %cst_48 : f32 to vector<1x512xf32>
    %142 = arith.subf %141, %59 : vector<1x512xf32>
    %c0_i32_49 = arith.constant 0 : i32
    %c7_i32_50 = arith.constant 7 : i32
    %143 = vector.broadcast %c0_i32_49 : i32 to vector<1x512xi32>
    %144 = arith.maxsi %143, %140 : vector<1x512xi32>
    %145 = vector.broadcast %c7_i32_50 : i32 to vector<1x512xi32>
    %146 = arith.minsi %145, %144 : vector<1x512xi32>
    %147 = vector.broadcast %146 : vector<1x512xi32> to vector<8x512xi32>
    %148 = arith.cmpi eq, %137, %147 : vector<8x512xi32>
    %cst_51 = arith.constant 0.000000e+00 : f32
    %149 = vector.shape_cast %142 : vector<1x512xf32> to vector<1x512xf32>
    %150 = vector.broadcast %149 : vector<1x512xf32> to vector<8x512xf32>
    %151 = vector.broadcast %cst_51 : f32 to vector<8x512xf32>
    %152 = arith.select %148, %150, %151 : vector<8x512xi1>, vector<8x512xf32>
    %153 = arith.addf %138, %152 : vector<8x512xf32>
    %c1_i32_52 = arith.constant 1 : i32
    %154 = vector.broadcast %c1_i32_52 : i32 to vector<1x512xi32>
    %155 = arith.addi %56, %154 : vector<1x512xi32>
    %c0_i32_53 = arith.constant 0 : i32
    %c7_i32_54 = arith.constant 7 : i32
    %156 = vector.broadcast %c0_i32_53 : i32 to vector<1x512xi32>
    %157 = arith.maxsi %156, %155 : vector<1x512xi32>
    %158 = vector.broadcast %c7_i32_54 : i32 to vector<1x512xi32>
    %159 = arith.minsi %158, %157 : vector<1x512xi32>
    %160 = vector.broadcast %159 : vector<1x512xi32> to vector<8x512xi32>
    %161 = arith.cmpi eq, %137, %160 : vector<8x512xi32>
    %cst_55 = arith.constant 0.000000e+00 : f32
    %162 = vector.shape_cast %59 : vector<1x512xf32> to vector<1x512xf32>
    %163 = vector.broadcast %162 : vector<1x512xf32> to vector<8x512xf32>
    %164 = vector.broadcast %cst_55 : f32 to vector<8x512xf32>
    %165 = arith.select %161, %163, %164 : vector<8x512xi1>, vector<8x512xf32>
    %166 = arith.addf %153, %165 : vector<8x512xf32>
    %167 = vector.extract_strided_slice %136 {offsets = [0, 0], sizes = [8, 512], strides = [1, 1]} : vector<32x512xf32> to vector<8x512xf32>
    %168 = arith.mulf %167, %166 : vector<8x512xf32>
    %cst_56 = arith.constant dense<0.000000e+00> : vector<512xf32>
    %169 = vector.multi_reduction <add>, %168, %cst_56 [0] : vector<8x512xf32> to vector<512xf32>
    %170 = vector.shape_cast %169 : vector<512xf32> to vector<1x512xf32>
    %171 = vector.extract_strided_slice %136 {offsets = [8, 0], sizes = [8, 512], strides = [1, 1]} : vector<32x512xf32> to vector<8x512xf32>
    %172 = arith.mulf %171, %166 : vector<8x512xf32>
    %cst_57 = arith.constant dense<0.000000e+00> : vector<512xf32>
    %173 = vector.multi_reduction <add>, %172, %cst_57 [0] : vector<8x512xf32> to vector<512xf32>
    %174 = vector.shape_cast %173 : vector<512xf32> to vector<1x512xf32>
    %175 = vector.extract_strided_slice %136 {offsets = [16, 0], sizes = [8, 512], strides = [1, 1]} : vector<32x512xf32> to vector<8x512xf32>
    %176 = arith.mulf %175, %166 : vector<8x512xf32>
    %cst_58 = arith.constant dense<0.000000e+00> : vector<512xf32>
    %177 = vector.multi_reduction <add>, %176, %cst_58 [0] : vector<8x512xf32> to vector<512xf32>
    %178 = vector.shape_cast %177 : vector<512xf32> to vector<1x512xf32>
    %179 = vector.extract_strided_slice %136 {offsets = [24, 0], sizes = [8, 512], strides = [1, 1]} : vector<32x512xf32> to vector<8x512xf32>
    %180 = arith.mulf %179, %166 : vector<8x512xf32>
    %cst_59 = arith.constant dense<0.000000e+00> : vector<512xf32>
    %181 = vector.multi_reduction <add>, %180, %cst_59 [0] : vector<8x512xf32> to vector<512xf32>
    %182 = vector.shape_cast %181 : vector<512xf32> to vector<1x512xf32>
    %183 = tpu.concatenate %170, %174, %178, %182 in 0 : vector<1x512xf32>, vector<1x512xf32>, vector<1x512xf32>, vector<1x512xf32> -> vector<4x512xf32>
    %c0_60 = arith.constant 0 : index
    %c0_61 = arith.constant 0 : index
    %c0_62 = arith.constant 0 : index
    %184 = vector.load %arg4[%c0_60, %c0_61, %c0_62] : memref<1x4x512xf32, #tpu.memory_space<vmem>>, vector<1x4x512xf32>
    %185 = vector.shape_cast %184 : vector<1x4x512xf32> to vector<4x512xf32>
    %186 = vector.shape_cast %183 : vector<4x512xf32> to vector<1x4x512xf32>
    tpu.vector_store %arg4[%c0_60, %c0_61, %c0_62], %186 {strides = array<i32>} : memref<1x4x512xf32, #tpu.memory_space<vmem>>, vector<1x4x512xf32>,
    return
  }
  func.func @transform_0(%arg0: i32, %arg1: i32) -> (i32, i32, i32) {
    %c0_i32 = arith.constant 0 : i32
    %c0_i32_0 = arith.constant 0 : i32
    return %arg0, %c0_i32, %arg1 : i32, i32, i32
  }
  func.func @transform_1(%arg0: i32, %arg1: i32) -> (i32, i32, i32) {
    %c0_i32 = arith.constant 0 : i32
    %c0_i32_0 = arith.constant 0 : i32
    %c0_i32_1 = arith.constant 0 : i32
    return %arg0, %c0_i32, %c0_i32_0 : i32, i32, i32
  }
  func.func @transform_2(%arg0: i32, %arg1: i32) -> (i32, i32, i32) {
    %c0_i32 = arith.constant 0 : i32
    %c0_i32_0 = arith.constant 0 : i32
    return %arg0, %c0_i32, %arg1 : i32, i32, i32
  }
}

</mosaic_0001>

<llo_original>
// kernel: tpu_custom_call.1
$region0: #{tpu_custom_call.1}
  #allocation0 [shape = 'u32[]', space=smem, size = 0x4, offset = 0x4, fixed_abs, tag = 'smem constant byte address 0x4 - core index']
  #allocation1 [shape = 'u32[72,128]{1,0:T(1,128)}', space=vmem, size = 0x9000, scoped, tag = 'internal scratch']
  %s0 = inlined_call_operand.vmem [shape: f32[2,3,512], index: 0, kind: input, shape index: {}]
  %s1 = inlined_call_operand.hbm [shape: f32[2,32,64], index: 1, kind: input, shape index: {}]
  %s2 = inlined_call_operand.hbm [shape: f32[2,4,512], index: 2, kind: output, shape index: {}]
  %s3 = sld [smem:[#allocation0]]
  $region45: #{tpu_custom_call.1} parent=0
    _
  %s5 = ssub.s32 1, %s3
  %s6 = scalar_select 0, %s5, %s3
  $region1: #{tpu_custom_call.1} parent=0
    #allocation2 [shape = 'u8[32768]{0}', space=vmem, size = 0x8000, scoped, tag = 'input window, operand 1']
    #allocation3 [shape = 's32[2]{0}', space=sflag, size = 0x8, scoped, tag = 'scoped memory for tpu_custom_call.1']
    #allocation4 [shape = 's32[2]{0}', space=sflag, size = 0x8, scoped, tag = 'scoped memory for tpu_custom_call.1']
    #allocation5 [shape = 'u8[16384]{0}', space=vmem, size = 0x4000, scoped, tag = 'output window, operand 0']
    %7 = vsyncpa [#allocation3], 0
    %s8 = scalar_lea.sflag [#allocation3], 1
    %9 = vsyncpa %s8, 0
    %10 = vsyncpa [#allocation4], 0
    %s11 = scalar_lea.sflag [#allocation4], 1
    %12 = vsyncpa %s11, 0
    loop: start=0, step=1, limit=4
    $region2: #{tpu_custom_call.1} parent=1 // loop_pre_header
      _
    $region3: #{tpu_custom_call.1} parent=1 // loop_header
      %s14 = sphi 0, %s18
      %p15 = scmp.ge.s32.totalorder %s14, 4
      %s21 = sphi 0, %s33
      %s22 = sphi 0, %s29
      %s23 = sphi 0, %s21
      %s24 = sphi 0, %s22
      %s25 = sphi 0, %s23
      %s26 = sphi 0, %s24
      %s38 = sphi 0, %s40
      %s41 = sphi 0, %s38
      %s42 = sphi 0, %s41
      %s58 = sphi 0, %s42
      %s64 = sphi 0, %s66
      %s67 = sphi 0, %s64
      %s68 = sphi 0, %s67
      %s84 = sphi 0, %s68
      %s92 = sphi 0, %s94
      %s95 = sphi 0, %s92
      %s96 = sphi 0, %s95
      %s112 = sphi 0, %s96
    $region4: #{tpu_custom_call.1} parent=1 // loop_header_branch
      %17 = sbr.rel (%p15) target = $region8
    $region5: #{tpu_custom_call.1} parent=1 // loop_body
      %s19 = ssub.s32 %s14, 1
      %s20 = ssub.s32 %s14, 2
      %s27 = sadd.s32 1, %s22
      %p28 = scmp.ge.s32.totalorder %s27, 1
      %s29 = scalar_select %p28, 0, %s27
      %s30 = sadd.s32 1, %s21
      %s31 = scalar_select %p28, %s30, %s21
      %p32 = scmp.ge.s32.totalorder %s31, 2
      %s33 = scalar_select %p32, 0, %s31
      %s34 = ssub.s32 %s21, %s33
      %s35 = ssub.s32 %s22, %s29
      %s36 = sor.u32 %s34, %s35
      %p37 = scmp.eq.s32.totalorder %s36, 0
      %s39 = sadd.s32 %s38, 1
      %s40 = scalar_select %p37, %s38, %s39
      %p43 = pneg %p37
      %p44 = scmp.eq.s32.totalorder %s14, 1
      %p45 = por %p43, %p44
      %p46 = scmp.ne.s32.totalorder %s38, %s41
      %p47 = scmp.eq.s32.totalorder %s14, 0
      %p48 = por %p46, %p47
      %p49 = scmp.ne.s32.totalorder %s38, %s41
      %p50 = scmp.eq.s32.totalorder %s19, 1
      %p51 = por %p49, %p50
      %p52 = scmp.ne.s32.totalorder %s41, %s42
      %p53 = scmp.eq.s32.totalorder %s19, 0
      %p54 = por %p52, %p53
      %p55 = scmp.ne.s32.totalorder %s41, %s42
      %p56 = scmp.eq.s32.totalorder %s20, 1
      %p57 = por %p55, %p56
      %p59 = scmp.ne.s32.totalorder %s42, %s58
      %p60 = scmp.eq.s32.totalorder %s20, 0
      %p61 = por %p59, %p60
      %s62 = ssub.s32 %s21, %s33
      %p63 = scmp.eq.s32.totalorder %s62, 0
      %s65 = sadd.s32 %s64, 1
      %s66 = scalar_select %p63, %s64, %s65
      %p69 = pneg %p63
      %p70 = scmp.eq.s32.totalorder %s14, 1
      %p71 = por %p69, %p70
      %p72 = scmp.ne.s32.totalorder %s64, %s67
      %p73 = scmp.eq.s32.totalorder %s14, 0
      %p74 = por %p72, %p73
      %p75 = scmp.ne.s32.totalorder %s64, %s67
      %p76 = scmp.eq.s32.totalorder %s19, 1
      %p77 = por %p75, %p76
      %p78 = scmp.ne.s32.totalorder %s67, %s68
      %p79 = scmp.eq.s32.totalorder %s19, 0
      %p80 = por %p78, %p79
      %p81 = scmp.ne.s32.totalorder %s67, %s68
      %p82 = scmp.eq.s32.totalorder %s20, 1
      %p83 = por %p81, %p82
      %p85 = scmp.ne.s32.totalorder %s68, %s84
      %p86 = scmp.eq.s32.totalorder %s20, 0
      %p87 = por %p85, %p86
      %s88 = ssub.s32 %s21, %s33
      %s89 = ssub.s32 %s22, %s29
      %s90 = sor.u32 %s88, %s89
      %p91 = scmp.eq.s32.totalorder %s90, 0
      %s93 = sadd.s32 %s92, 1
      %s94 = scalar_select %p91, %s92, %s93
      %p97 = pneg %p91
      %p98 = scmp.eq.s32.totalorder %s14, 1
      %p99 = por %p97, %p98
      %p100 = scmp.ne.s32.totalorder %s92, %s95
      %p101 = scmp.eq.s32.totalorder %s14, 0
      %p102 = por %p100, %p101
      %p103 = scmp.ne.s32.totalorder %s92, %s95
      %p104 = scmp.eq.s32.totalorder %s19, 1
      %p105 = por %p103, %p104
      %p106 = scmp.ne.s32.totalorder %s95, %s96
      %p107 = scmp.eq.s32.totalorder %s19, 0
      %p108 = por %p106, %p107
      %p109 = scmp.ne.s32.totalorder %s95, %s96
      %p110 = scmp.eq.s32.totalorder %s20, 1
      %p111 = por %p109, %p110
      %p113 = scmp.ne.s32.totalorder %s96, %s112
      %p114 = scmp.eq.s32.totalorder %s20, 0
      %p115 = por %p113, %p114
      %p116 = scmp.le.s32.totalorder 1, %s14
      %p117 = scmp.lt.s32.totalorder %s14, 3
      %p118 = pnand %p116, %p117
      %p119 = pneg %p118
      // Predicated region
      $region9: #{tpu_custom_call.1} parent=5 // pred_check
        _
      $region10: #{tpu_custom_call.1} parent=5 // pred_check_branch
        %121 = sbr.rel (%p118) target = $region12
      $region11: #{tpu_custom_call.1} parent=5 // pred_region
        %s122 = ssub.s32 %s14, 1
      $region12: #{tpu_custom_call.1} parent=5 // pred_fallthru
        _
      %p123 = scmp.lt.s32.totalorder %s14, 2
      // Predicated region
      $region13: #{tpu_custom_call.1} parent=5 // pred_check
        %p124 = pneg %p123
      $region14: #{tpu_custom_call.1} parent=5 // pred_check_branch
        %126 = sbr.rel (%p124) target = $region16
      $region15: #{tpu_custom_call.1} parent=5 // pred_region
        // Predicated region
        $region17: #{tpu_custom_call.1} parent=15 // pred_check
          %p127 = pneg %p48
        $region18: #{tpu_custom_call.1} parent=15 // pred_check_branch
          %129 = sbr.rel (%p127) target = $region20
        $region19: #{tpu_custom_call.1} parent=15 // pred_region
          %s130 = smul.u32 4, %s22
          %p131 = scmp.lt.s32.totalorder %s21, 1
          %s132 = scalar_select %p131, %s21, 1
          %p133 = scmp.lt.s32.totalorder %s130, 3
          %s134 = scalar_select %p133, %s130, 3
          %s135 = smul.addr %s132, 4
          %s136 = sadd.s32 %s134, %s135
          %s137 = smul.addr %s136, 4
          %s138 = scalar_lea.vmem %s0, %s137
          %s139 = smul.u32 4, %s22
        $region20: #{tpu_custom_call.1} parent=15 // pred_fallthru
          _
        // Predicated region
        $region21: #{tpu_custom_call.1} parent=15 // pred_check
          %p140 = pneg %p74
        $region22: #{tpu_custom_call.1} parent=15 // pred_check_branch
          %142 = sbr.rel (%p140) target = $region24
        $region23: #{tpu_custom_call.1} parent=15 // pred_region
          %s143 = sand.u32 %s64, 1
          %s144 = scalar_lea.sflag [#allocation3], %s143
          %s145 = sand.u32 %s64, 1
          %s146 = smul.addr %s145, 32
          %s147 = scalar_lea.vmem [#allocation2], %s146
          %149 = vsyncadd %s144, 0
          %s150 = smul.addr %s21, 4
          %s151 = smul.addr %s150, 8
          %s152 = scalar_lea.hbm %s1, %s151
          %s153 = sshll.u32 %s152, 4
          %s154 = int_to_ptr.hbm [resolvable:$true] %s153
          %s155 = sshll.u32 %s147, 4
          %s156 = int_to_ptr.vmem [resolvable:$true] %s155
          %161 = dma.hbm_to_vmem [thread:$0]  %s154, 512, %s156, %s144, 128, 128, 8
        $region24: #{tpu_custom_call.1} parent=15 // pred_fallthru
          _
      $region16: #{tpu_custom_call.1} parent=5 // pred_fallthru
        _
      %p162 = scmp.le.s32.totalorder 1, %s14
      %p163 = scmp.lt.s32.totalorder %s14, 3
      %p164 = pnand %p162, %p163
      %p165 = pneg %p164
      // Predicated region
      $region25: #{tpu_custom_call.1} parent=5 // pred_check
        _
      $region26: #{tpu_custom_call.1} parent=5 // pred_check_branch
        %167 = sbr.rel (%p164) target = $region28
      $region27: #{tpu_custom_call.1} parent=5 // pred_region
        %s168 = ssub.s32 %s14, 1
        %s169 = sand.u32 %s67, 1
        %s170 = scalar_lea.sflag [#allocation3], %s169
        %s171 = sand.u32 %s67, 1
        %s172 = smul.addr %s171, 32
        %s173 = scalar_lea.vmem [#allocation2], %s172
        // Predicated region
        $region29: #{tpu_custom_call.1} parent=27 // pred_check
          %p174 = pneg %p80
        $region30: #{tpu_custom_call.1} parent=27 // pred_check_branch
          %176 = sbr.rel (%p174) target = $region32
        $region31: #{tpu_custom_call.1} parent=27 // pred_region
          %178 = dma.done %s170, 512
        $region32: #{tpu_custom_call.1} parent=27 // pred_fallthru
          _
        %s179 = smul.u32 4, %s24
        %p180 = scmp.lt.s32.totalorder %s23, 1
        %s181 = scalar_select %p180, %s23, 1
        %p182 = scmp.lt.s32.totalorder %s179, 3
        %s183 = scalar_select %p182, %s179, 3
        %s184 = smul.addr %s181, 4
        %s185 = sadd.s32 %s183, %s184
        %s186 = smul.addr %s185, 4
        %s187 = scalar_lea.vmem %s0, %s186
        %p188 = pneg %p54
        %p189 = pneg %p51
        %s190 = sand.u32 %s67, 1
        %s191 = scalar_lea.sflag [#allocation3], %s190
        %s192 = sand.u32 %s67, 1
        %s193 = smul.addr %s192, 32
        %s194 = scalar_lea.vmem [#allocation2], %s193
        %p195 = pneg %p80
        %p196 = pneg %p77
        %p197 = pneg %p108
        %p198 = pneg %p105
        %s199 = sand.u32 %s95, 1
        %s200 = scalar_lea.sflag [#allocation4], %s199
        %s201 = sand.u32 %s95, 1
        %s202 = smul.addr %s201, 16
        %s203 = scalar_lea.vmem [#allocation5], %s202
        %s204 = smul.u32 4, %s24
        %p205 = scmp.lt.s32.totalorder %s23, 1
        %s206 = scalar_select %p205, %s23, 1
        %p207 = scmp.lt.s32.totalorder %s204, 3
        %s208 = scalar_select %p207, %s204, 3
        %s209 = smul.addr %s206, 4
        %s210 = sadd.s32 %s208, %s209
        %s211 = smul.addr %s210, 4
        %s212 = scalar_lea.vmem %s0, %s211
        %s213 = smul.u32 4, %s24
        %s214 = smul.u32 4, %s24
        %v215 = vld [vmem:[%s212] sm:$0x77]
        %v216 = vld [vmem:[%s212 + $0x8] sm:$0x77]
        %v217 = vrcp.pop 7.0
        %v218 = vmul.f32 7.0, %v217
        %v219 = vsub.f32 1.0, %v218
        %v220 = vmul.f32 %v217, %v219
        %v221 = vadd.f32 %v217, %v220
        %vm222 = vweird.f32 %v217
        %v223 = vsel %vm222, %v217, %v221
        %v224 = vmul.f32 %v215, %v223
        %v225 = vmul.f32 %v216, %v223
        %v226 = vsub.f32 %v224, 0.5
        %v227 = vsub.f32 %v225, 0.5
        %v228 = vmul.f32 %v226, 2.0
        %v229 = vmul.f32 %v227, 2.0
        %v230 = vadd.f32 %v228, 1.0
        %v231 = vadd.f32 %v229, 1.0
        %v232 = vmul.f32 %v230, 0.5
        %v233 = vmul.f32 %v231, 0.5
        %v234 = vmul.f32 %v232, 7.0
        %v235 = vmul.f32 %v233, 7.0
        %v236 = vmax.f32 %v234, 0.0
        %v237 = vmax.f32 %v235, 0.0
        %v238 = vmin.f32 %v236, 7.0
        %v239 = vmin.f32 %v237, 7.0
        %v240 = vfloor.f32 %v238
        %v241 = vfloor.f32 %v239
        %v242 = vcvt.f32.s32.to.zero.pseudo %v240
        %v243 = vcvt.f32.s32.to.zero.pseudo %v241
        %v244 = vsub.f32 %v238, %v240
        %v245 = vsub.f32 %v239, %v241
        %v246 = vsub.f32 1.0, %v244
        %v247 = vsub.f32 1.0, %v245
        %vm248 = vcmp.gt.s32.totalorder %v242, 0
        %v249 = vsel %vm248, %v242, 0
        %vm250 = vcmp.gt.s32.totalorder %v243, 0
        %v251 = vsel %vm250, %v243, 0
        %vm252 = vcmp.lt.s32.totalorder %v249, 7
        %v253 = vsel %vm252, %v249, 7
        %vm254 = vcmp.lt.s32.totalorder %v251, 7
        %v255 = vsel %vm254, %v251, 7
        %vm256 = vcmp.eq.s32.totalorder %v253, 0
        %vm257 = vcmp.eq.s32.totalorder %v255, 0
        %vm258 = vcmp.eq.s32.totalorder %v253, 1
        %vm259 = vcmp.eq.s32.totalorder %v255, 1
        %vm260 = vcmp.eq.s32.totalorder %v253, 2
        %vm261 = vcmp.eq.s32.totalorder %v255, 2
        %vm262 = vcmp.eq.s32.totalorder %v253, 3
        %vm263 = vcmp.eq.s32.totalorder %v255, 3
        %vm264 = vcmp.eq.s32.totalorder %v253, 4
        %vm265 = vcmp.eq.s32.totalorder %v255, 4
        %vm266 = vcmp.eq.s32.totalorder %v253, 5
        %vm267 = vcmp.eq.s32.totalorder %v255, 5
        %vm268 = vcmp.eq.s32.totalorder %v253, 6
        %vm269 = vcmp.eq.s32.totalorder %v255, 6
        %vm270 = vcmp.eq.s32.totalorder %v253, 7
        %vm271 = vcmp.eq.s32.totalorder %v255, 7
        %v272 = vsel %vm256, %v246, 0.0
        %v273 = vsel %vm257, %v247, 0.0
        %v274 = vsel %vm258, %v246, 0.0
        %v275 = vsel %vm259, %v247, 0.0
        %v276 = vsel %vm260, %v246, 0.0
        %v277 = vsel %vm261, %v247, 0.0
        %v278 = vsel %vm262, %v246, 0.0
        %v279 = vsel %vm263, %v247, 0.0
        %v280 = vsel %vm264, %v246, 0.0
        %v281 = vsel %vm265, %v247, 0.0
        %v282 = vsel %vm266, %v246, 0.0
        %v283 = vsel %vm267, %v247, 0.0
        %v284 = vsel %vm268, %v246, 0.0
        %v285 = vsel %vm269, %v247, 0.0
        %v286 = vsel %vm270, %v246, 0.0
        %v287 = vsel %vm271, %v247, 0.0
        %v288 = vadd.f32 %v272, 0.0
        %v289 = vadd.f32 %v273, 0.0
        %v290 = vadd.f32 %v274, 0.0
        %v291 = vadd.f32 %v275, 0.0
        %v292 = vadd.f32 %v276, 0.0
        %v293 = vadd.f32 %v277, 0.0
        %v294 = vadd.f32 %v278, 0.0
        %v295 = vadd.f32 %v279, 0.0
        %v296 = vadd.f32 %v280, 0.0
        %v297 = vadd.f32 %v281, 0.0
        %v298 = vadd.f32 %v282, 0.0
        %v299 = vadd.f32 %v283, 0.0
        %v300 = vadd.f32 %v284, 0.0
        %v301 = vadd.f32 %v285, 0.0
        %v302 = vadd.f32 %v286, 0.0
        %v303 = vadd.f32 %v287, 0.0
        %v304 = vadd.s32 %v242, 1
        %v305 = vadd.s32 %v243, 1
        %vm306 = vcmp.gt.s32.totalorder %v304, 0
        %v307 = vsel %vm306, %v304, 0
        %vm308 = vcmp.gt.s32.totalorder %v305, 0
        %v309 = vsel %vm308, %v305, 0
        %vm310 = vcmp.lt.s32.totalorder %v307, 7
        %v311 = vsel %vm310, %v307, 7
        %vm312 = vcmp.lt.s32.totalorder %v309, 7
        %v313 = vsel %vm312, %v309, 7
        %vm314 = vcmp.eq.s32.totalorder %v311, 0
        %vm315 = vcmp.eq.s32.totalorder %v313, 0
        %vm316 = vcmp.eq.s32.totalorder %v311, 1
        %vm317 = vcmp.eq.s32.totalorder %v313, 1
        %vm318 = vcmp.eq.s32.totalorder %v311, 2
        %vm319 = vcmp.eq.s32.totalorder %v313, 2
        %vm320 = vcmp.eq.s32.totalorder %v311, 3
        %vm321 = vcmp.eq.s32.totalorder %v313, 3
        %vm322 = vcmp.eq.s32.totalorder %v311, 4
        %vm323 = vcmp.eq.s32.totalorder %v313, 4
        %vm324 = vcmp.eq.s32.totalorder %v311, 5
        %vm325 = vcmp.eq.s32.totalorder %v313, 5
        %vm326 = vcmp.eq.s32.totalorder %v311, 6
        %vm327 = vcmp.eq.s32.totalorder %v313, 6
        %vm328 = vcmp.eq.s32.totalorder %v311, 7
        %vm329 = vcmp.eq.s32.totalorder %v313, 7
        %v330 = vsel %vm314, %v244, 0.0
        %v331 = vsel %vm315, %v245, 0.0
        %v332 = vsel %vm316, %v244, 0.0
        %v333 = vsel %vm317, %v245, 0.0
        %v334 = vsel %vm318, %v244, 0.0
        %v335 = vsel %vm319, %v245, 0.0
        %v336 = vsel %vm320, %v244, 0.0
        %v337 = vsel %vm321, %v245, 0.0
        %v338 = vsel %vm322, %v244, 0.0
        %v339 = vsel %vm323, %v245, 0.0
        %v340 = vsel %vm324, %v244, 0.0
        %v341 = vsel %vm325, %v245, 0.0
        %v342 = vsel %vm326, %v244, 0.0
        %v343 = vsel %vm327, %v245, 0.0
        %v344 = vsel %vm328, %v244, 0.0
        %v345 = vsel %vm329, %v245, 0.0
        %v346 = vadd.f32 %v288, %v330
        %v347 = vadd.f32 %v289, %v331
        %v348 = vadd.f32 %v290, %v332
        %v349 = vadd.f32 %v291, %v333
        %v350 = vadd.f32 %v292, %v334
        %v351 = vadd.f32 %v293, %v335
        %v352 = vadd.f32 %v294, %v336
        %v353 = vadd.f32 %v295, %v337
        %v354 = vadd.f32 %v296, %v338
        %v355 = vadd.f32 %v297, %v339
        %v356 = vadd.f32 %v298, %v340
        %v357 = vadd.f32 %v299, %v341
        %v358 = vadd.f32 %v300, %v342
        %v359 = vadd.f32 %v301, %v343
        %v360 = vadd.f32 %v302, %v344
        %v361 = vadd.f32 %v303, %v345
        %v362 = vlaneseq
        %v363 = vshrl.u32 %v362, 7
        %v364 = vperm.slane %v253, 2
        %v365 = vperm.slane %v253, 6
        %v366 = vperm.slane %v255, 2
        %v367 = vperm.slane %v255, 6
        %v368 = vperm.slane %v364, 2
        %v369 = vperm.slane %v365, 2
        %v370 = vperm.slane %v366, 2
        %v371 = vperm.slane %v367, 2
        %vm372 = vcmp.eq.s32.totalorder %v363, %v368
        %vm373 = vcmp.eq.s32.totalorder %v363, %v369
        %vm374 = vcmp.eq.s32.totalorder %v363, %v370
        %vm375 = vcmp.eq.s32.totalorder %v363, %v371
        %v378 = vperm.slane %v246, 2
        %v379 = vperm.slane %v246, 6
        %v380 = vperm.slane %v247, 2
        %v381 = vperm.slane %v247, 6
        %v386 = vperm.slane %v378, 2
        %v387 = vperm.slane %v379, 2
        %v388 = vperm.slane %v380, 2
        %v389 = vperm.slane %v381, 2
        %v390 = vsel %vm372, %v386, 0.0
        %v391 = vsel %vm373, %v387, 0.0
        %v392 = vsel %vm374, %v388, 0.0
        %v393 = vsel %vm375, %v389, 0.0
        %v394 = vadd.f32 %v390, 0.0
        %v395 = vadd.f32 %v391, 0.0
        %v396 = vadd.f32 %v392, 0.0
        %v397 = vadd.f32 %v393, 0.0
        %v398 = vperm.slane %v311, 2
        %v399 = vperm.slane %v311, 6
        %v400 = vperm.slane %v313, 2
        %v401 = vperm.slane %v313, 6
        %v402 = vperm.slane %v398, 2
        %v403 = vperm.slane %v399, 2
        %v404 = vperm.slane %v400, 2
        %v405 = vperm.slane %v401, 2
        %vm406 = vcmp.eq.s32.totalorder %v363, %v402
        %vm407 = vcmp.eq.s32.totalorder %v363, %v403
        %vm408 = vcmp.eq.s32.totalorder %v363, %v404
        %vm409 = vcmp.eq.s32.totalorder %v363, %v405
        %v412 = vperm.slane %v244, 2
        %v413 = vperm.slane %v244, 6
        %v414 = vperm.slane %v245, 2
        %v415 = vperm.slane %v245, 6
        %v420 = vperm.slane %v412, 2
        %v421 = vperm.slane %v413, 2
        %v422 = vperm.slane %v414, 2
        %v423 = vperm.slane %v415, 2
        %v424 = vsel %vm406, %v420, 0.0
        %v425 = vsel %vm407, %v421, 0.0
        %v426 = vsel %vm408, %v422, 0.0
        %v427 = vsel %vm409, %v423, 0.0
        %v428 = vadd.f32 %v394, %v424
        %v429 = vadd.f32 %v395, %v425
        %v430 = vadd.f32 %v396, %v426
        %v431 = vadd.f32 %v397, %v427
        %v448 = vperm.slane %v346, 1
        %v449 = vperm.slane %v346, 5
        %v450 = vperm.slane %v347, 1
        %v451 = vperm.slane %v347, 5
        %v452 = vperm.slane %v348, 1
        %v453 = vperm.slane %v348, 5
        %v454 = vperm.slane %v349, 1
        %v455 = vperm.slane %v349, 5
        %v456 = vperm.slane %v350, 1
        %v457 = vperm.slane %v350, 5
        %v458 = vperm.slane %v351, 1
        %v459 = vperm.slane %v351, 5
        %v460 = vperm.slane %v352, 1
        %v461 = vperm.slane %v352, 5
        %v462 = vperm.slane %v353, 1
        %v463 = vperm.slane %v353, 5
        %v464 = vperm.slane %v354, 1
        %v465 = vperm.slane %v354, 5
        %v466 = vperm.slane %v355, 1
        %v467 = vperm.slane %v355, 5
        %v468 = vperm.slane %v356, 1
        %v469 = vperm.slane %v356, 5
        %v470 = vperm.slane %v357, 1
        %v471 = vperm.slane %v357, 5
        %v472 = vperm.slane %v358, 1
        %v473 = vperm.slane %v358, 5
        %v474 = vperm.slane %v359, 1
        %v475 = vperm.slane %v359, 5
        %v476 = vperm.slane %v360, 1
        %v477 = vperm.slane %v360, 5
        %v478 = vperm.slane %v361, 1
        %v479 = vperm.slane %v361, 5
        %v512 = vperm.slane %v448, 1
        %v513 = vperm.slane %v449, 1
        %v514 = vperm.slane %v450, 1
        %v515 = vperm.slane %v451, 1
        %v516 = vperm.slane %v452, 1
        %v517 = vperm.slane %v453, 1
        %v518 = vperm.slane %v454, 1
        %v519 = vperm.slane %v455, 1
        %v520 = vperm.slane %v456, 1
        %v521 = vperm.slane %v457, 1
        %v522 = vperm.slane %v458, 1
        %v523 = vperm.slane %v459, 1
        %v524 = vperm.slane %v460, 1
        %v525 = vperm.slane %v461, 1
        %v526 = vperm.slane %v462, 1
        %v527 = vperm.slane %v463, 1
        %v528 = vperm.slane %v464, 1
        %v529 = vperm.slane %v465, 1
        %v530 = vperm.slane %v466, 1
        %v531 = vperm.slane %v467, 1
        %v532 = vperm.slane %v468, 1
        %v533 = vperm.slane %v469, 1
        %v534 = vperm.slane %v470, 1
        %v535 = vperm.slane %v471, 1
        %v536 = vperm.slane %v472, 1
        %v537 = vperm.slane %v473, 1
        %v538 = vperm.slane %v474, 1
        %v539 = vperm.slane %v475, 1
        %v540 = vperm.slane %v476, 1
        %v541 = vperm.slane %v477, 1
        %v542 = vperm.slane %v478, 1
        %v543 = vperm.slane %v479, 1
        %v544 = vmul.f32 %v512, %v428
        %v545 = vmul.f32 %v513, %v429
        %v546 = vmul.f32 %v514, %v430
        %v547 = vmul.f32 %v515, %v431
        %v548 = vmul.f32 %v516, %v428
        %v549 = vmul.f32 %v517, %v429
        %v550 = vmul.f32 %v518, %v430
        %v551 = vmul.f32 %v519, %v431
        %v552 = vmul.f32 %v520, %v428
        %v553 = vmul.f32 %v521, %v429
        %v554 = vmul.f32 %v522, %v430
        %v555 = vmul.f32 %v523, %v431
        %v556 = vmul.f32 %v524, %v428
        %v557 = vmul.f32 %v525, %v429
        %v558 = vmul.f32 %v526, %v430
        %v559 = vmul.f32 %v527, %v431
        %v560 = vmul.f32 %v528, %v428
        %v561 = vmul.f32 %v529, %v429
        %v562 = vmul.f32 %v530, %v430
        %v563 = vmul.f32 %v531, %v431
        %v564 = vmul.f32 %v532, %v428
        %v565 = vmul.f32 %v533, %v429
        %v566 = vmul.f32 %v534, %v430
        %v567 = vmul.f32 %v535, %v431
        %v568 = vmul.f32 %v536, %v428
        %v569 = vmul.f32 %v537, %v429
        %v570 = vmul.f32 %v538, %v430
        %v571 = vmul.f32 %v539, %v431
        %v572 = vmul.f32 %v540, %v428
        %v573 = vmul.f32 %v541, %v429
        %v574 = vmul.f32 %v542, %v430
        %v575 = vmul.f32 %v543, %v431
        %v576 = vld [vmem:[%s173] sm:$0xff]
        %v577 = vld [vmem:[%s173 + $0x8] sm:$0xff]
        %v578 = vld [vmem:[%s173 + $0x10] sm:$0xff]
        %v579 = vld [vmem:[%s173 + $0x18] sm:$0xff]
        %vm580 = vcmask 523264
        %v582 = vsel %vm580, %v576, 0
        %v585 = vsel %vm580, %v577, 0
        %v588 = vsel %vm580, %v578, 0
        %v591 = vsel %vm580, %v579, 0
        %593 = vmatpush.msra.mxu0 0.0
        %594 = vmatpush.msra.mxu0 0.0
        %595 = vmatpush.msra.mxu0 0.0
        %596 = vmatpush.msra.mxu0 0.0
        %597 = vmatpush.msra.mxu0 0.0
        %598 = vmatpush.msra.mxu0 0.0
        %599 = vmatpush.msra.mxu0 0.0
        %600 = vmatpush.msra.mxu0 0.0
        %601 = vmatpush.msra.mxu0 %v572
        %602 = vmatpush.msra.mxu0 %v568
        %603 = vmatpush.msra.mxu0 %v564
        %604 = vmatpush.msra.mxu0 %v560
        %605 = vmatpush.msra.mxu0 %v556
        %606 = vmatpush.msra.mxu0 %v552
        %607 = vmatpush.msra.mxu0 %v548
        %608 = vmatpush.msra.mxu0 %v544
        %609 = vmatmul.f32.gmra.mxu0 %v582
        %v610 = vpop.f32.mrf.mxu0
        %v611 = vadd.f32 0.0, %v610
        %612 = vmatmul.f32.gmra.mxu0 %v585
        %v613 = vpop.f32.mrf.mxu0
        %v614 = vadd.f32 0.0, %v613
        %615 = vmatmul.f32.gmra.mxu0 %v588
        %v616 = vpop.f32.mrf.mxu0
        %v617 = vadd.f32 0.0, %v616
        %618 = vmatmul.f32.gmra.mxu0 %v591
        %v619 = vpop.f32.mrf.mxu0
        %v620 = vadd.f32 0.0, %v619
        %621 = vdwg.mxu0
        %622 = vmatpush.msra.mxu0 0.0
        %623 = vmatpush.msra.mxu0 0.0
        %624 = vmatpush.msra.mxu0 0.0
        %625 = vmatpush.msra.mxu0 0.0
        %626 = vmatpush.msra.mxu0 0.0
        %627 = vmatpush.msra.mxu0 0.0
        %628 = vmatpush.msra.mxu0 0.0
        %629 = vmatpush.msra.mxu0 0.0
        %630 = vmatpush.msra.mxu0 %v573
        %631 = vmatpush.msra.mxu0 %v569
        %632 = vmatpush.msra.mxu0 %v565
        %633 = vmatpush.msra.mxu0 %v561
        %634 = vmatpush.msra.mxu0 %v557
        %635 = vmatpush.msra.mxu0 %v553
        %636 = vmatpush.msra.mxu0 %v549
        %637 = vmatpush.msra.mxu0 %v545
        %638 = vmatmul.f32.gmra.mxu0 %v582
        %v639 = vpop.f32.mrf.mxu0
        %v640 = vadd.f32 0.0, %v639
        %641 = vmatmul.f32.gmra.mxu0 %v585
        %v642 = vpop.f32.mrf.mxu0
        %v643 = vadd.f32 0.0, %v642
        %644 = vmatmul.f32.gmra.mxu0 %v588
        %v645 = vpop.f32.mrf.mxu0
        %v646 = vadd.f32 0.0, %v645
        %647 = vmatmul.f32.gmra.mxu0 %v591
        %v648 = vpop.f32.mrf.mxu0
        %v649 = vadd.f32 0.0, %v648
        %650 = vdwg.mxu0
        %651 = vmatpush.msra.mxu0 0.0
        %652 = vmatpush.msra.mxu0 0.0
        %653 = vmatpush.msra.mxu0 0.0
        %654 = vmatpush.msra.mxu0 0.0
        %655 = vmatpush.msra.mxu0 0.0
        %656 = vmatpush.msra.mxu0 0.0
        %657 = vmatpush.msra.mxu0 0.0
        %658 = vmatpush.msra.mxu0 0.0
        %659 = vmatpush.msra.mxu0 %v574
        %660 = vmatpush.msra.mxu0 %v570
        %661 = vmatpush.msra.mxu0 %v566
        %662 = vmatpush.msra.mxu0 %v562
        %663 = vmatpush.msra.mxu0 %v558
        %664 = vmatpush.msra.mxu0 %v554
        %665 = vmatpush.msra.mxu0 %v550
        %666 = vmatpush.msra.mxu0 %v546
        %667 = vmatmul.f32.gmra.mxu0 %v582
        %v668 = vpop.f32.mrf.mxu0
        %v669 = vadd.f32 0.0, %v668
        %670 = vmatmul.f32.gmra.mxu0 %v585
        %v671 = vpop.f32.mrf.mxu0
        %v672 = vadd.f32 0.0, %v671
        %673 = vmatmul.f32.gmra.mxu0 %v588
        %v674 = vpop.f32.mrf.mxu0
        %v675 = vadd.f32 0.0, %v674
        %676 = vmatmul.f32.gmra.mxu0 %v591
        %v677 = vpop.f32.mrf.mxu0
        %v678 = vadd.f32 0.0, %v677
        %679 = vdwg.mxu0
        %680 = vmatpush.msra.mxu0 0.0
        %681 = vmatpush.msra.mxu0 0.0
        %682 = vmatpush.msra.mxu0 0.0
        %683 = vmatpush.msra.mxu0 0.0
        %684 = vmatpush.msra.mxu0 0.0
        %685 = vmatpush.msra.mxu0 0.0
        %686 = vmatpush.msra.mxu0 0.0
        %687 = vmatpush.msra.mxu0 0.0
        %688 = vmatpush.msra.mxu0 %v575
        %689 = vmatpush.msra.mxu0 %v571
        %690 = vmatpush.msra.mxu0 %v567
        %691 = vmatpush.msra.mxu0 %v563
        %692 = vmatpush.msra.mxu0 %v559
        %693 = vmatpush.msra.mxu0 %v555
        %694 = vmatpush.msra.mxu0 %v551
        %695 = vmatpush.msra.mxu0 %v547
        %696 = vmatmul.f32.gmra.mxu0 %v582
        %v697 = vpop.f32.mrf.mxu0
        %v698 = vadd.f32 0.0, %v697
        %699 = vmatmul.f32.gmra.mxu0 %v585
        %v700 = vpop.f32.mrf.mxu0
        %v701 = vadd.f32 0.0, %v700
        %702 = vmatmul.f32.gmra.mxu0 %v588
        %v703 = vpop.f32.mrf.mxu0
        %v704 = vadd.f32 0.0, %v703
        %705 = vmatmul.f32.gmra.mxu0 %v591
        %v706 = vpop.f32.mrf.mxu0
        %v707 = vadd.f32 0.0, %v706
        %708 = vdwg.mxu0
        %v709 = vperm.slane %v253, 0
        %v710 = vperm.slane %v253, 4
        %v711 = vperm.slane %v255, 0
        %v712 = vperm.slane %v255, 4
        %v713 = vperm.slane %v709, 0
        %v714 = vperm.slane %v710, 0
        %v715 = vperm.slane %v711, 0
        %v716 = vperm.slane %v712, 0
        %vm717 = vcmp.eq.s32.totalorder %v363, %v713
        %vm718 = vcmp.eq.s32.totalorder %v363, %v714
        %vm719 = vcmp.eq.s32.totalorder %v363, %v715
        %vm720 = vcmp.eq.s32.totalorder %v363, %v716
        %v721 = vperm.slane %v246, 0
        %v722 = vperm.slane %v246, 4
        %v723 = vperm.slane %v247, 0
        %v724 = vperm.slane %v247, 4
        %v729 = vperm.slane %v721, 0
        %v730 = vperm.slane %v722, 0
        %v731 = vperm.slane %v723, 0
        %v732 = vperm.slane %v724, 0
        %v733 = vsel %vm717, %v729, 0.0
        %v734 = vsel %vm718, %v730, 0.0
        %v735 = vsel %vm719, %v731, 0.0
        %v736 = vsel %vm720, %v732, 0.0
        %v737 = vadd.f32 %v733, 0.0
        %v738 = vadd.f32 %v734, 0.0
        %v739 = vadd.f32 %v735, 0.0
        %v740 = vadd.f32 %v736, 0.0
        %v741 = vperm.slane %v311, 0
        %v742 = vperm.slane %v311, 4
        %v743 = vperm.slane %v313, 0
        %v744 = vperm.slane %v313, 4
        %v745 = vperm.slane %v741, 0
        %v746 = vperm.slane %v742, 0
        %v747 = vperm.slane %v743, 0
        %v748 = vperm.slane %v744, 0
        %vm749 = vcmp.eq.s32.totalorder %v363, %v745
        %vm750 = vcmp.eq.s32.totalorder %v363, %v746
        %vm751 = vcmp.eq.s32.totalorder %v363, %v747
        %vm752 = vcmp.eq.s32.totalorder %v363, %v748
        %v753 = vperm.slane %v244, 0
        %v754 = vperm.slane %v244, 4
        %v755 = vperm.slane %v245, 0
        %v756 = vperm.slane %v245, 4
        %v761 = vperm.slane %v753, 0
        %v762 = vperm.slane %v754, 0
        %v763 = vperm.slane %v755, 0
        %v764 = vperm.slane %v756, 0
        %v765 = vsel %vm749, %v761, 0.0
        %v766 = vsel %vm750, %v762, 0.0
        %v767 = vsel %vm751, %v763, 0.0
        %v768 = vsel %vm752, %v764, 0.0
        %v769 = vadd.f32 %v737, %v765
        %v770 = vadd.f32 %v738, %v766
        %v771 = vadd.f32 %v739, %v767
        %v772 = vadd.f32 %v740, %v768
        %v773 = vmul.f32 %v611, %v769
        %v774 = vmul.f32 %v640, %v770
        %v775 = vmul.f32 %v669, %v771
        %v776 = vmul.f32 %v698, %v772
        %v777 = vrot.slane %v773, 4
        %v778 = vadd.f32 %v773, %v777
        %v779 = vrot.slane %v778, 2
        %v780 = vadd.f32 %v778, %v779
        %v781 = vrot.slane %v780, 1
        %v782 = vadd.f32 %v780, %v781
        %v783 = vrot.slane %v774, 4
        %v784 = vadd.f32 %v774, %v783
        %v785 = vrot.slane %v784, 2
        %v786 = vadd.f32 %v784, %v785
        %v787 = vrot.slane %v786, 1
        %v788 = vadd.f32 %v786, %v787
        %v789 = vrot.slane %v775, 4
        %v790 = vadd.f32 %v775, %v789
        %v791 = vrot.slane %v790, 2
        %v792 = vadd.f32 %v790, %v791
        %v793 = vrot.slane %v792, 1
        %v794 = vadd.f32 %v792, %v793
        %v795 = vrot.slane %v776, 4
        %v796 = vadd.f32 %v776, %v795
        %v797 = vrot.slane %v796, 2
        %v798 = vadd.f32 %v796, %v797
        %v799 = vrot.slane %v798, 1
        %v800 = vadd.f32 %v798, %v799
        %v801 = vmul.f32 %v614, %v769
        %v802 = vmul.f32 %v643, %v770
        %v803 = vmul.f32 %v672, %v771
        %v804 = vmul.f32 %v701, %v772
        %v805 = vrot.slane %v801, 4
        %v806 = vadd.f32 %v801, %v805
        %v807 = vrot.slane %v806, 2
        %v808 = vadd.f32 %v806, %v807
        %v809 = vrot.slane %v808, 1
        %v810 = vadd.f32 %v808, %v809
        %v811 = vrot.slane %v802, 4
        %v812 = vadd.f32 %v802, %v811
        %v813 = vrot.slane %v812, 2
        %v814 = vadd.f32 %v812, %v813
        %v815 = vrot.slane %v814, 1
        %v816 = vadd.f32 %v814, %v815
        %v817 = vrot.slane %v803, 4
        %v818 = vadd.f32 %v803, %v817
        %v819 = vrot.slane %v818, 2
        %v820 = vadd.f32 %v818, %v819
        %v821 = vrot.slane %v820, 1
        %v822 = vadd.f32 %v820, %v821
        %v823 = vrot.slane %v804, 4
        %v824 = vadd.f32 %v804, %v823
        %v825 = vrot.slane %v824, 2
        %v826 = vadd.f32 %v824, %v825
        %v827 = vrot.slane %v826, 1
        %v828 = vadd.f32 %v826, %v827
        %v829 = vmul.f32 %v617, %v769
        %v830 = vmul.f32 %v646, %v770
        %v831 = vmul.f32 %v675, %v771
        %v832 = vmul.f32 %v704, %v772
        %v833 = vrot.slane %v829, 4
        %v834 = vadd.f32 %v829, %v833
        %v835 = vrot.slane %v834, 2
        %v836 = vadd.f32 %v834, %v835
        %v837 = vrot.slane %v836, 1
        %v838 = vadd.f32 %v836, %v837
        %v839 = vrot.slane %v830, 4
        %v840 = vadd.f32 %v830, %v839
        %v841 = vrot.slane %v840, 2
        %v842 = vadd.f32 %v840, %v841
        %v843 = vrot.slane %v842, 1
        %v844 = vadd.f32 %v842, %v843
        %v845 = vrot.slane %v831, 4
        %v846 = vadd.f32 %v831, %v845
        %v847 = vrot.slane %v846, 2
        %v848 = vadd.f32 %v846, %v847
        %v849 = vrot.slane %v848, 1
        %v850 = vadd.f32 %v848, %v849
        %v851 = vrot.slane %v832, 4
        %v852 = vadd.f32 %v832, %v851
        %v853 = vrot.slane %v852, 2
        %v854 = vadd.f32 %v852, %v853
        %v855 = vrot.slane %v854, 1
        %v856 = vadd.f32 %v854, %v855
        %v857 = vmul.f32 %v620, %v769
        %v858 = vmul.f32 %v649, %v770
        %v859 = vmul.f32 %v678, %v771
        %v860 = vmul.f32 %v707, %v772
        %v861 = vrot.slane %v857, 4
        %v862 = vadd.f32 %v857, %v861
        %v863 = vrot.slane %v862, 2
        %v864 = vadd.f32 %v862, %v863
        %v865 = vrot.slane %v864, 1
        %v866 = vadd.f32 %v864, %v865
        %v867 = vrot.slane %v858, 4
        %v868 = vadd.f32 %v858, %v867
        %v869 = vrot.slane %v868, 2
        %v870 = vadd.f32 %v868, %v869
        %v871 = vrot.slane %v870, 1
        %v872 = vadd.f32 %v870, %v871
        %v873 = vrot.slane %v859, 4
        %v874 = vadd.f32 %v859, %v873
        %v875 = vrot.slane %v874, 2
        %v876 = vadd.f32 %v874, %v875
        %v877 = vrot.slane %v876, 1
        %v878 = vadd.f32 %v876, %v877
        %v879 = vrot.slane %v860, 4
        %v880 = vadd.f32 %v860, %v879
        %v881 = vrot.slane %v880, 2
        %v882 = vadd.f32 %v880, %v881
        %v883 = vrot.slane %v882, 1
        %v884 = vadd.f32 %v882, %v883
        %vm885 = vcmask 1040384
        %v886 = vsel %vm885, %v782, %v810
        %v887 = vsel %vm885, %v788, %v816
        %v888 = vsel %vm885, %v794, %v822
        %v889 = vsel %vm885, %v800, %v828
        %vm890 = vcmask 1041408
        %v891 = vsel %vm890, %v886, %v838
        %v892 = vsel %vm890, %v887, %v844
        %v893 = vsel %vm890, %v888, %v850
        %v894 = vsel %vm890, %v889, %v856
        %vm895 = vcmask 1042432
        %v896 = vsel %vm895, %v891, %v866
        %v897 = vsel %vm895, %v892, %v872
        %v898 = vsel %vm895, %v893, %v878
        %v899 = vsel %vm895, %v894, %v884
        %v904 = vrot.slane %v897, 4
        %v905 = vrot.slane %v899, 4
        %vm906 = vcmask 1043456
        %v907 = vsel %vm906, %v896, %v904
        %v908 = vsel %vm906, %v898, %v905
        %911 = vst [vmem:[%s203] sm:$0xff] %v907
        %912 = vst [vmem:[%s203 + $0x8] sm:$0xff] %v908
        %s913 = sand.u32 %s95, 1
        %s914 = scalar_lea.sflag [#allocation4], %s913
        %s915 = sand.u32 %s95, 1
        %s916 = smul.addr %s915, 16
        %s917 = scalar_lea.vmem [#allocation5], %s916
        // Predicated region
        $region33: #{tpu_custom_call.1} parent=27 // pred_check
          %p918 = pneg %p105
        $region34: #{tpu_custom_call.1} parent=27 // pred_check_branch
          %920 = sbr.rel (%p918) target = $region36
        $region35: #{tpu_custom_call.1} parent=27 // pred_region
          %s921 = smul.u32 4, %s24
          %923 = vsyncadd %s914, 0
          %s924 = smul.addr %s23, 4
          %s925 = sadd.s32 %s921, %s924
          %s926 = smul.addr %s925, 4
          %s927 = scalar_lea.hbm %s2, %s926
          %s929 = sshll.u32 %s917, 4
          %s930 = int_to_ptr.vmem [resolvable:$true] %s929
          %s931 = sshll.u32 %s927, 4
          %s932 = int_to_ptr.hbm [resolvable:$true] %s931
          %934 = dma.vmem_to_hbm [thread:$0]  %s930, 256, %s932, %s914
        $region36: #{tpu_custom_call.1} parent=27 // pred_fallthru
          _
      $region28: #{tpu_custom_call.1} parent=5 // pred_fallthru
        _
      %p935 = scmp.le.s32.totalorder 2, %s14
      // Predicated region
      $region37: #{tpu_custom_call.1} parent=5 // pred_check
        %p936 = pneg %p935
      $region38: #{tpu_custom_call.1} parent=5 // pred_check_branch
        %938 = sbr.rel (%p936) target = $region40
      $region39: #{tpu_custom_call.1} parent=5 // pred_region
        %s939 = ssub.s32 %s14, 2
        // Predicated region
        $region41: #{tpu_custom_call.1} parent=39 // pred_check
          %p940 = pneg %p111
        $region42: #{tpu_custom_call.1} parent=39 // pred_check_branch
          %942 = sbr.rel (%p940) target = $region44
        $region43: #{tpu_custom_call.1} parent=39 // pred_region
          %s943 = sand.u32 %s96, 1
          %s944 = scalar_lea.sflag [#allocation4], %s943
          %s945 = sand.u32 %s96, 1
          %s946 = smul.addr %s945, 16
          %s947 = scalar_lea.vmem [#allocation5], %s946
          %949 = dma.done %s944, 256
        $region44: #{tpu_custom_call.1} parent=39 // pred_fallthru
          _
      $region40: #{tpu_custom_call.1} parent=5 // pred_fallthru
        _
    $region6: #{tpu_custom_call.1} parent=1 // loop_footer
      %s18 = sadd.s32 1, %s14
    $region7: #{tpu_custom_call.1} parent=1 // loop_footer_branch
      %13 = sbr.rel target = $region3
    $region8: #{tpu_custom_call.1} parent=1 // loop_exit
      _
    %950 = vsyncpa [#allocation3], 1
    %s951 = scalar_lea.sflag [#allocation3], 1
    %952 = vsyncpa %s951, 1
    %953 = vsyncpa [#allocation4], 1
    %s954 = scalar_lea.sflag [#allocation4], 1
    %955 = vsyncpa %s954, 1

</llo_original>
